<compile_context>
chip_gen: v7x
topology: tpu7x:2x2x1
jax: 0.10.0
libtpu: 0.0.40
codegen_flags: <defaults>
</compile_context>

<pallas_src>
import functools
import math

import jax
import jax.numpy as jnp
from jax import lax
from jax.experimental import pallas as pl
from jax.experimental.pallas import tpu as pltpu


# ---------------------------------------------------------------------------
# generation-aware defaults
# ---------------------------------------------------------------------------

def _round_up(n: int, m: int) -> int:
    return ((n + m - 1) // m) * m


def _vmem_capacity_bytes() -> int:
    try:
        return int(pltpu.get_tpu_info().vmem_capacity_bytes)
    except Exception:
        return 64 << 20          # conservative (v7x-sized) fallback


_VMEM_CAP = _vmem_capacity_bytes()
# ~96 MiB on v5e/v6e (128 MiB VMEM), ~48 MiB on v7x (64 MiB VMEM).
_VMEM_CEIL = max((_VMEM_CAP * 3) // 4, 16 << 20)
# Bigger row tiles when the part has 128 MiB VMEM (v5e/v6e), 256 on v7x.
_DEFAULT_TM = 512 if _VMEM_CAP >= (96 << 20) else 256


def _compiler_params(vmem_needed: int) -> pltpu.CompilerParams:
    limit = int(vmem_needed) + (8 << 20)
    limit = min(max(limit, 16 << 20), _VMEM_CEIL)
    return pltpu.CompilerParams(
        dimension_semantics=("parallel",),
        vmem_limit_bytes=limit,
    )


# ---------------------------------------------------------------------------
# generic row-tiled pallas_call helper
# ---------------------------------------------------------------------------

def _row_call(kernel, row_inputs, consts, out_feats, out_dtypes, *, tm, cost,
              extra_f32_cols=0):
    """Run `kernel(row_tile_refs..., const_refs..., out_tile_refs...)` over row tiles.

    row_inputs: 2-D (rows, f_i) activations, tiled along rows.
    consts:     grid-invariant 2-D operands (weights / (1, N) bias rows), resident.
    out_feats:  output widths (each output is (rows, out_feat)).
    Ragged last tiles are handled by Pallas (masked writeback), no pad/slice here.
    """
    rows = row_inputs[0].shape[0]
    tm_eff = min(tm, rows)                     # tm is a multiple of 16; rows==tm_eff
    n_tiles = pl.cdiv(rows, tm_eff)            # uses the "full dim" exception.

    # VMEM budget: double-buffered row tiles + resident consts + f32 intermediates
    # (incl. the tm x hidden GELU intermediate via extra_f32_cols).
    vmem = 0
    for a in row_inputs:
        vmem += 2 * tm_eff * a.shape[1] * a.dtype.itemsize
    for of, dt in zip(out_feats, out_dtypes):
        vmem += 2 * tm_eff * of * jnp.dtype(dt).itemsize
    for c in consts:
        vmem += 2 * int(c.size) * c.dtype.itemsize
    max_in = max(a.shape[1] for a in row_inputs)
    vmem += 4 * tm_eff * (max_in + sum(out_feats) + 2 * extra_f32_cols)

    in_specs = [pl.BlockSpec((tm_eff, a.shape[1]), lambda i: (i, 0))
                for a in row_inputs]
    in_specs += [pl.BlockSpec(c.shape, lambda i: (0, 0)) for c in consts]
    out_specs = tuple(pl.BlockSpec((tm_eff, of), lambda i: (i, 0))
                      for of in out_feats)
    out_shape = tuple(jax.ShapeDtypeStruct((rows, of), dt)
                      for of, dt in zip(out_feats, out_dtypes))

    outs = pl.pallas_call(
        kernel,
        out_shape=out_shape,
        grid_spec=pltpu.PrefetchScalarGridSpec(
            num_scalar_prefetch=0,
            grid=(n_tiles,),
            in_specs=in_specs,
            out_specs=out_specs,
        ),
        compiler_params=_compiler_params(vmem),
        cost_estimate=cost,
    )(*row_inputs, *consts)
    return outs


# ---------------------------------------------------------------------------
# kernels
# ---------------------------------------------------------------------------

def _layernorm_f32(x, g_ref, b_ref, eps):
    x = x.astype(jnp.float32)
    mu = jnp.mean(x, axis=-1, keepdims=True)
    xc = x - mu
    var = jnp.mean(xc * xc, axis=-1, keepdims=True)
    return xc * lax.rsqrt(var + eps) * g_ref[...] + b_ref[...]


def _linear_kernel(x_ref, w_ref, b_ref, o_ref):
    acc = jnp.dot(x_ref[...], w_ref[...], preferred_element_type=jnp.float32)
    o_ref[...] = (acc + b_ref[...]).astype(o_ref.dtype)


def _ln_linear_kernel(x_ref, g_ref, bln_ref, w_ref, b_ref, o_ref, *, eps):
    y = _layernorm_f32(x_ref[...], g_ref, bln_ref, eps).astype(w_ref.dtype)
    acc = jnp.dot(y, w_ref[...], preferred_element_type=jnp.float32)
    o_ref[...] = (acc + b_ref[...]).astype(o_ref.dtype)


def _ln_qkv_kernel(z_ref, g_ref, bln_ref, wq_ref, bq_ref, wk_ref, bk_ref,
                   wv_ref, bv_ref, q_ref, k_ref, v_ref, *, eps):
    y = _layernorm_f32(z_ref[...], g_ref, bln_ref, eps).astype(wq_ref.dtype)
    q_ref[...] = (jnp.dot(y, wq_ref[...], preferred_element_type=jnp.float32)
                  + bq_ref[...]).astype(q_ref.dtype)
    k_ref[...] = (jnp.dot(y, wk_ref[...], preferred_element_type=jnp.float32)
                  + bk_ref[...]).astype(k_ref.dtype)
    v_ref[...] = (jnp.dot(y, wv_ref[...], preferred_element_type=jnp.float32)
                  + bv_ref[...]).astype(v_ref.dtype)


def _proj_res_kernel(a_ref, z_ref, w_ref, b_ref, o_ref):
    acc = jnp.dot(a_ref[...], w_ref[...], preferred_element_type=jnp.float32)
    acc = acc + b_ref[...]
    o_ref[...] = (z_ref[...].astype(jnp.float32) + acc).astype(o_ref.dtype)


def _ln_mlp_res_kernel(z_ref, g_ref, bln_ref, w1_ref, b1_ref, w2_ref, b2_ref,
                       o_ref, *, eps):
    z = z_ref[...]
    y = _layernorm_f32(z, g_ref, bln_ref, eps).astype(w1_ref.dtype)
    h = jnp.dot(y, w1_ref[...], preferred_element_type=jnp.float32) + b1_ref[...]
    h = jax.nn.gelu(h, approximate=False)          # exact erf GELU == torch.nn.GELU()
    acc = jnp.dot(h.astype(w2_ref.dtype), w2_ref[...],
                  preferred_element_type=jnp.float32) + b2_ref[...]
    o_ref[...] = (z.astype(jnp.float32) + acc).astype(o_ref.dtype)


def _attention_kernel(q_ref, k_ref, v_ref, o_ref, *, n_heads, scale, t_real,
                      approx_recip):
    # One batch element, all heads per grid step (lane-dense (T, D) output).
    T = q_ref.shape[1]
    D = q_ref.shape[2]
    hd = D // n_heads
    q = q_ref[0].astype(jnp.float32)               # (T, D)
    k = k_ref[0].astype(jnp.float32)
    v = v_ref[0]

    if t_real < T:                                 # mask padded key tokens
        col = lax.broadcasted_iota(jnp.int32, (T, T), 1)
        key_bias = jnp.where(col < t_real, 0.0, -1e30).astype(jnp.float32)
    else:
        key_bias = None

    outs = []
    for h in range(n_heads):                       # static, unrolled head loop
        lo, hi = h * hd, (h + 1) * hd
        qh, kh, vh = q[:, lo:hi], k[:, lo:hi], v[:, lo:hi]
        s = lax.dot_general(qh, kh, (((1,), (1,)), ((), ())),
                            preferred_element_type=jnp.float32) * scale
        if key_bias is not None:
            s = s + key_bias
        m = jnp.max(s, axis=-1, keepdims=True)
        e = jnp.exp(s - m)
        denom = jnp.sum(e, axis=-1, keepdims=True)
        if approx_recip:
            p = e * pl.reciprocal(denom, approx=True)
        else:
            p = e / denom
        outs.append(jnp.dot(p.astype(vh.dtype), vh,
                            preferred_element_type=jnp.float32))
    o_ref[0] = jnp.concatenate(outs, axis=-1).astype(o_ref.dtype)


# ---------------------------------------------------------------------------
# wrappers
# ---------------------------------------------------------------------------

def linear_pallas(x, w, b, *, out_dtype=None, tm=None):
    fin, fout = w.shape
    lead = x.shape[:-1]
    rows = math.prod(lead)
    x2 = x.reshape(rows, fin)
    out_dtype = out_dtype or x.dtype
    tm = tm or _DEFAULT_TM
    consts = [w.astype(x.dtype), b.reshape(1, fout).astype(jnp.float32)]
    cost = pl.CostEstimate(
        flops=int(2 * rows * fin * fout), transcendentals=0,
        bytes_accessed=int((rows * fin + fin * fout + rows * fout)
                           * x2.dtype.itemsize))
    (o2,) = _row_call(_linear_kernel, [x2], consts, [fout], [out_dtype],
                      tm=tm, cost=cost)
    return o2.reshape(*lead, fout)


def ln_qkv_pallas(z, g, b_ln, wq, bq, wk, bk, wv, bv, *, eps=1e-6, tm=None):
    B, T, D = z.shape
    rows = B * T
    z2 = z.reshape(rows, D)
    tm = tm or _DEFAULT_TM
    cd = z.dtype
    consts = [g.reshape(1, D).astype(jnp.float32),
              b_ln.reshape(1, D).astype(jnp.float32),
              wq.astype(cd), bq.reshape(1, D).astype(jnp.float32),
              wk.astype(cd), bk.reshape(1, D).astype(jnp.float32),
              wv.astype(cd), bv.reshape(1, D).astype(jnp.float32)]
    cost = pl.CostEstimate(
        flops=int(6 * rows * D * D + 8 * rows * D),
        transcendentals=int(rows),
        bytes_accessed=int((4 * rows * D + 3 * D * D) * cd.itemsize))
    kern = functools.partial(_ln_qkv_kernel, eps=eps)
    q2, k2, v2 = _row_call(kern, [z2], consts, [D, D, D], [cd, cd, cd],
                           tm=tm, cost=cost, extra_f32_cols=D)
    return (q2.reshape(B, T, D), k2.reshape(B, T, D), v2.reshape(B, T, D))


def proj_residual_pallas(a, z, w, b, *, tm=None):
    B, T, D = z.shape
    rows = B * T
    a2 = a.reshape(rows, D)
    z2 = z.reshape(rows, D)
    tm = tm or _DEFAULT_TM
    cd = z.dtype
    consts = [w.astype(cd), b.reshape(1, D).astype(jnp.float32)]
    cost = pl.CostEstimate(
        flops=int(2 * rows * D * D + rows * D), transcendentals=0,
        bytes_accessed=int((3 * rows * D + D * D) * cd.itemsize))
    (o2,) = _row_call(_proj_res_kernel, [a2, z2], consts, [D], [cd],
                      tm=tm, cost=cost)
    return o2.reshape(B, T, D)


def ln_mlp_residual_pallas(z, g, b_ln, w1, b1, w2, b2, *, eps=1e-6, tm=None):
    B, T, D = z.shape
    hid = w1.shape[1]
    rows = B * T
    z2 = z.reshape(rows, D)
    tm = tm or _DEFAULT_TM
    cd = z.dtype
    consts = [g.reshape(1, D).astype(jnp.float32),
              b_ln.reshape(1, D).astype(jnp.float32),
              w1.astype(cd), b1.reshape(1, hid).astype(jnp.float32),
              w2.astype(cd), b2.reshape(1, D).astype(jnp.float32)]
    cost = pl.CostEstimate(
        flops=int(4 * rows * D * hid + 10 * rows * (D + hid)),
        transcendentals=int(rows * hid + rows),
        bytes_accessed=int((2 * rows * D + 2 * D * hid) * cd.itemsize))
    kern = functools.partial(_ln_mlp_res_kernel, eps=eps)
    # extra_f32_cols: tm x hidden f32 GELU intermediate (v7x VMEM-budget fix).
    (o2,) = _row_call(kern, [z2], consts, [D], [cd], tm=tm, cost=cost,
                      extra_f32_cols=hid)
    return o2.reshape(B, T, D)


def ln_linear_pallas(x, g, b_ln, w, b, *, eps=1e-6, out_dtype=jnp.float32, tm=None):
    rows, D = x.shape
    fout = w.shape[1]
    tm = tm or _DEFAULT_TM
    cd = x.dtype
    consts = [g.reshape(1, D).astype(jnp.float32),
              b_ln.reshape(1, D).astype(jnp.float32),
              w.astype(cd), b.reshape(1, fout).astype(jnp.float32)]
    cost = pl.CostEstimate(
        flops=int(2 * rows * D * fout + 8 * rows * D),
        transcendentals=int(rows),
        bytes_accessed=int((rows * D + D * fout) * cd.itemsize + rows * fout * 4))
    kern = functools.partial(_ln_linear_kernel, eps=eps)
    (o2,) = _row_call(kern, [x], consts, [fout], [out_dtype], tm=tm, cost=cost)
    return o2


def attention_pallas(q, k, v, *, n_heads, scale, t_real):
    """softmax(q k^T * scale) v, all heads of one batch element per grid step."""
    B, T, D = q.shape
    itemsize = q.dtype.itemsize
    vmem_needed = (2 * 4 * T * D * itemsize            # dbl-buffered q/k/v/o blocks
                   + 4 * T * D * 4                     # f32 copies of q/k, out concat
                   + 2 * n_heads * T * T * 4)          # per-head score tiles
    cost = pl.CostEstimate(
        flops=int(4 * B * n_heads * T * T * (D // n_heads)),
        transcendentals=int(B * n_heads * T * T),
        bytes_accessed=int(4 * B * T * D * itemsize))
    approx = q.dtype != jnp.float32                    # EUP approx recip in bf16 mode
    kern = functools.partial(_attention_kernel, n_heads=n_heads, scale=scale,
                             t_real=t_real, approx_recip=bool(approx))
    return pl.pallas_call(
        kern,
        out_shape=jax.ShapeDtypeStruct((B, T, D), q.dtype),
        grid_spec=pltpu.PrefetchScalarGridSpec(
            num_scalar_prefetch=0,
            grid=(B,),
            in_specs=[pl.BlockSpec((1, T, D), lambda b: (b, 0, 0))
                      for _ in range(3)],
            out_specs=pl.BlockSpec((1, T, D), lambda b: (b, 0, 0)),
        ),
        compiler_params=_compiler_params(vmem_needed),
        cost_estimate=cost,
    )(q, k, v)


# ---------------------------------------------------------------------------
# full ViT forward (Pallas) + pure-JAX reference
# ---------------------------------------------------------------------------

def vit_forward_pallas(params, x, *, n_heads, patch_size,
                       compute_dtype=jnp.bfloat16):
    B, C, H, W = x.shape
    p = patch_size
    Hp, Wp = H // p, W // p
    D = params["pos_embed"].shape[-1]

    # PatchEmbed: Conv2d(k=p, s=p) == non-overlapping patch extraction + matmul.
    xc = x.astype(compute_dtype)
    patches = xc.reshape(B, C, Hp, p, Wp, p).transpose(0, 2, 4, 1, 3, 5)
    patches = patches.reshape(B, Hp * Wp, C * p * p)
    w_pe = params["patch_w"].reshape(D, C * p * p).T
    z = linear_pallas(patches, w_pe, params["patch_b"])                  # (B, N, D)

    # CLS + positional embedding; pad tokens ONCE to a multiple of 16.
    cls = jnp.broadcast_to(params["cls_token"].astype(compute_dtype), (B, 1, D))
    z = jnp.concatenate([cls, z], axis=1) + params["pos_embed"].astype(compute_dtype)
    t_real = z.shape[1]
    t_pad = _round_up(t_real, 16)
    if t_pad != t_real:
        z = jnp.pad(z, ((0, 0), (0, t_pad - t_real), (0, 0)))

    hd = D // n_heads
    scale = 1.0 / (hd ** 0.5)

    for blk in params["blocks"]:
        wq, wk, wv = (blk["qkv_w"][:, :D], blk["qkv_w"][:, D:2 * D],
                      blk["qkv_w"][:, 2 * D:])
        bq, bk, bv = (blk["qkv_b"][:D], blk["qkv_b"][D:2 * D], blk["qkv_b"][2 * D:])
        # --- attention branch: LN fused into qkv, residual fused into proj ---
        q, k, v = ln_qkv_pallas(z, blk["n1_g"], blk["n1_b"],
                                wq, bq, wk, bk, wv, bv)
        a = attention_pallas(q, k, v, n_heads=n_heads, scale=scale, t_real=t_real)
        z = proj_residual_pallas(a, z, blk["proj_w"], blk["proj_b"])
        # --- MLP branch: LN + MLP + residual fused in one kernel ---
        z = ln_mlp_residual_pallas(z, blk["n2_g"], blk["n2_b"],
                                   blk["fc1_w"], blk["fc1_b"],
                                   blk["fc2_w"], blk["fc2_b"])

    cls_final = z[:, 0]                                                  # (B, D)
    # Final LN only matters for the CLS row -> fuse LN into the head matmul.
    return ln_linear_pallas(cls_final, params["norm_g"], params["norm_b"],
                            params["head_w"], params["head_b"],
                            out_dtype=jnp.float32)                       # (B, n_cls)


def _ln_ref(x, g, b, eps=1e-6):
    mu = jnp.mean(x, axis=-1, keepdims=True)
    var = jnp.mean((x - mu) ** 2, axis=-1, keepdims=True)
    return (x - mu) * lax.rsqrt(var + eps) * g + b


def vit_forward_ref(params, x, *, n_heads, patch_size):
    B = x.shape[0]
    D = params["pos_embed"].shape[-1]
    p = patch_size
    y = lax.conv_general_dilated(x, params["patch_w"], window_strides=(p, p),
                                 padding="VALID",
                                 dimension_numbers=("NCHW", "OIHW", "NCHW"))
    y = y + params["patch_b"].reshape(1, -1, 1, 1)
    z = y.reshape(B, D, -1).transpose(0, 2, 1)
    cls = jnp.broadcast_to(params["cls_token"], (B, 1, D))
    z = jnp.concatenate([cls, z], axis=1) + params["pos_embed"]
    T = z.shape[1]
    hd = D // n_heads
    scale = 1.0 / (hd ** 0.5)
    for blk in params["blocks"]:
        h = _ln_ref(z, blk["n1_g"], blk["n1_b"])
        qkv = h @ blk["qkv_w"] + blk["qkv_b"]
        qkv = qkv.reshape(B, T, 3, n_heads, hd).transpose(2, 0, 3, 1, 4)
        q, k, v = qkv[0], qkv[1], qkv[2]
        s = jnp.einsum("bhqd,bhkd->bhqk", q, k) * scale
        a = jax.nn.softmax(s, axis=-1)
        o = jnp.einsum("bhqk,bhkd->bqhd", a, v).reshape(B, T, D)
        z = z + (o @ blk["proj_w"] + blk["proj_b"])
        h = _ln_ref(z, blk["n2_g"], blk["n2_b"])
        hmid = jax.nn.gelu(h @ blk["fc1_w"] + blk["fc1_b"], approximate=False)
        z = z + (hmid @ blk["fc2_w"] + blk["fc2_b"])
    z = _ln_ref(z, params["norm_g"], params["norm_b"])
    return z[:, 0] @ params["head_w"] + params["head_b"]


def init_vit_params(key, *, img_size, patch_size, in_chans, n_classes,
                    embed_dim, depth, n_heads, mlp_ratio):
    n_patches = (img_size // patch_size) ** 2
    hidden = int(embed_dim * mlp_ratio)

    def linear_init(k, fan_in, w_shape, b_shape):
        kw, kb = jax.random.split(k)
        bound = 1.0 / (fan_in ** 0.5)
        w = jax.random.uniform(kw, w_shape, minval=-bound, maxval=bound,
                               dtype=jnp.float32)
        b = jax.random.uniform(kb, b_shape, minval=-bound, maxval=bound,
                               dtype=jnp.float32)
        return w, b

    keys = jax.random.split(key, 5 + depth)
    params = {}
    params["patch_w"], params["patch_b"] = linear_init(
        keys[0], in_chans * patch_size * patch_size,
        (embed_dim, in_chans, patch_size, patch_size), (embed_dim,))
    params["cls_token"] = 0.02 * jax.random.normal(
        keys[1], (1, 1, embed_dim), dtype=jnp.float32)
    params["pos_embed"] = 0.02 * jax.random.normal(
        keys[2], (1, 1 + n_patches, embed_dim), dtype=jnp.float32)
    kg, kb = jax.random.split(keys[3])
    params["norm_g"] = 1.0 + 0.1 * jax.random.normal(kg, (embed_dim,), dtype=jnp.float32)
    params["norm_b"] = 0.1 * jax.random.normal(kb, (embed_dim,), dtype=jnp.float32)
    params["head_w"], params["head_b"] = linear_init(
        keys[4], embed_dim, (embed_dim, n_classes), (n_classes,))

    blocks = []
    for i in range(depth):
        bk = jax.random.split(keys[5 + i], 8)
        blk = {}
        blk["n1_g"] = 1.0 + 0.1 * jax.random.normal(bk[0], (embed_dim,), dtype=jnp.float32)
        blk["n1_b"] = 0.1 * jax.random.normal(bk[1], (embed_dim,), dtype=jnp.float32)
        blk["n2_g"] = 1.0 + 0.1 * jax.random.normal(bk[2], (embed_dim,), dtype=jnp.float32)
        blk["n2_b"] = 0.1 * jax.random.normal(bk[3], (embed_dim,), dtype=jnp.float32)
        # VisionTransformer default qkv_bias=False -> zero bias (same semantics).
        blk["qkv_w"], _ = linear_init(bk[4], embed_dim,
                                      (embed_dim, 3 * embed_dim), (3 * embed_dim,))
        blk["qkv_b"] = jnp.zeros((3 * embed_dim,), jnp.float32)
        blk["proj_w"], blk["proj_b"] = linear_init(
            bk[5], embed_dim, (embed_dim, embed_dim), (embed_dim,))
        blk["fc1_w"], blk["fc1_b"] = linear_init(
            bk[6], embed_dim, (embed_dim, hidden), (hidden,))
        blk["fc2_w"], blk["fc2_b"] = linear_init(
            bk[7], hidden, (hidden, embed_dim), (embed_dim,))
        blocks.append(blk)
    params["blocks"] = blocks
    return params


if __name__ == "__main__":
    # Small ViT consistent with the module: 16x16 RGB image, 8x8 patches
    # (-> 4 patches + CLS = 5 tokens, padded to 16), embed_dim=128, 4 heads,
    # depth=2, MLP hidden = 4*128 = 512, 16 classes.
    img_size, patch_size, in_chans = 16, 8, 3
    embed_dim, depth, n_heads, mlp_ratio, n_classes = 128, 2, 4, 4.0, 16
    B = 2

    root = jax.random.PRNGKey(0)
    kparams, kx = jax.random.split(root, 2)
    params = init_vit_params(kparams, img_size=img_size, patch_size=patch_size,
                             in_chans=in_chans, n_classes=n_classes,
                             embed_dim=embed_dim, depth=depth, n_heads=n_heads,
                             mlp_ratio=mlp_ratio)
    x = jax.random.normal(kx, (B, in_chans, img_size, img_size), dtype=jnp.float32)

    ref = vit_forward_ref(params, x, n_heads=n_heads, patch_size=patch_size)

    # f32 compute path (exact softmax divide) vs. pure-JAX reference.
    logits_f32 = vit_forward_pallas(params, x, n_heads=n_heads,
                                    patch_size=patch_size,
                                    compute_dtype=jnp.float32)
    logits_f32 = jax.block_until_ready(logits_f32)
    assert logits_f32.shape == (B, n_classes)
    assert jnp.allclose(logits_f32, ref, atol=2e-3, rtol=2e-3), \
        "f32 ViT mismatch vs reference"

    # Default bf16 path (bf16 weights/activations, f32 accumulation, EUP recip).
    logits_bf16 = vit_forward_pallas(params, x, n_heads=n_heads,
                                     patch_size=patch_size)
    logits_bf16 = jax.block_until_ready(logits_bf16)
    assert logits_bf16.shape == (B, n_classes)
    assert bool(jnp.all(jnp.isfinite(logits_bf16)))
    max_err = float(jnp.max(jnp.abs(logits_bf16 - ref)))
    assert max_err < 0.5, f"bf16 ViT deviates too much from reference: {max_err}"

    print("KERNEL_OK")
</pallas_src>

<mosaic_0001>
module attributes {stable_mosaic.version = 11 : i64} {
  func.func @_linear_kernel(%arg0: i32, %arg1: memref<8x192xf32, #tpu.memory_space<vmem>>, %arg2: memref<192x128xf32, #tpu.memory_space<vmem>>, %arg3: memref<1x128xf32, #tpu.memory_space<vmem>>, %arg4: memref<8x128xf32, #tpu.memory_space<vmem>>) attributes {dimension_semantics = [#tpu.dimension_semantics<parallel>], iteration_bounds = array<i64: 1>, scalar_prefetch = 0 : i64, scratch_operands = 0 : i64, tpu.core_type = #tpu.core_type<tc>, window_params = [{transform_indices = @transform_0, window_bounds = array<i64: 8, 192>}, {pipeline_mode = #tpu.pipeline_mode<synchronous>, transform_indices = @transform_1, window_bounds = array<i64: 192, 128>}, {pipeline_mode = #tpu.pipeline_mode<synchronous>, transform_indices = @transform_2, window_bounds = array<i64: 1, 128>}, {transform_indices = @transform_3, window_bounds = array<i64: 8, 128>}]} {
    %c0 = arith.constant 0 : index
    %c0_0 = arith.constant 0 : index
    %0 = vector.load %arg1[%c0, %c0_0] : memref<8x192xf32, #tpu.memory_space<vmem>>, vector<8x192xf32>
    %c0_1 = arith.constant 0 : index
    %c0_2 = arith.constant 0 : index
    %1 = vector.load %arg2[%c0_1, %c0_2] : memref<192x128xf32, #tpu.memory_space<vmem>>, vector<192x128xf32>
    %cst = arith.constant dense<0.000000e+00> : vector<8x128xf32>
    %2 = tpu.matmul %0, %1, %cst {dimension_numbers = #tpu.dot_dimension_numbers<[1], [0], [0], [1], [0, 0, 1, 1], [], []>} : vector<8x192xf32>, vector<192x128xf32>, vector<8x128xf32> -> vector<8x128xf32>
    %c0_3 = arith.constant 0 : index
    %c0_4 = arith.constant 0 : index
    %3 = vector.load %arg3[%c0_3, %c0_4] : memref<1x128xf32, #tpu.memory_space<vmem>>, vector<1x128xf32>
    %4 = vector.broadcast %3 : vector<1x128xf32> to vector<8x128xf32>
    %5 = arith.addf %2, %4 : vector<8x128xf32>
    %c0_5 = arith.constant 0 : index
    %c0_6 = arith.constant 0 : index
    %6 = vector.load %arg4[%c0_5, %c0_6] : memref<8x128xf32, #tpu.memory_space<vmem>>, vector<8x128xf32>
    tpu.vector_store %arg4[%c0_5, %c0_6], %5 {strides = array<i32>} : memref<8x128xf32, #tpu.memory_space<vmem>>, vector<8x128xf32>,
    return
  }
  func.func @transform_0(%arg0: i32) -> (i32, i32) {
    %c0_i32 = arith.constant 0 : i32
    %c0_i32_0 = arith.constant 0 : i32
    return %arg0, %c0_i32 : i32, i32
  }
  func.func @transform_1(%arg0: i32) -> (i32, i32) {
    %c0_i32 = arith.constant 0 : i32
    %c0_i32_0 = arith.constant 0 : i32
    %c0_i32_1 = arith.constant 0 : i32
    return %c0_i32, %c0_i32_0 : i32, i32
  }
  func.func @transform_2(%arg0: i32) -> (i32, i32) {
    %c0_i32 = arith.constant 0 : i32
    %c0_i32_0 = arith.constant 0 : i32
    %c0_i32_1 = arith.constant 0 : i32
    return %c0_i32, %c0_i32_0 : i32, i32
  }
  func.func @transform_3(%arg0: i32) -> (i32, i32) {
    %c0_i32 = arith.constant 0 : i32
    %c0_i32_0 = arith.constant 0 : i32
    return %arg0, %c0_i32 : i32, i32
  }
}

</mosaic_0001>

<llo_original>
// kernel: tpu_custom_call.1
$region0: #{tpu_custom_call.1}
  #allocation0 [shape = 'u32[]', space=smem, size = 0x4, offset = 0x4, fixed_abs, tag = 'smem constant byte address 0x4 - core index']
  #allocation1 [shape = 'u32[144,128]{1,0:T(1,128)}', space=vmem, size = 0x12000, scoped, tag = 'internal scratch']
  %s0 = inlined_call_operand.hbm [shape: f32[8,192], index: 0, kind: input, shape index: {}]
  %s1 = inlined_call_operand.hbm [shape: f32[192,128], index: 1, kind: input, shape index: {}]
  %s2 = inlined_call_operand.vmem [shape: f32[1,128], index: 2, kind: input, shape index: {}]
  %s3 = inlined_call_operand.hbm [shape: f32[8,128], index: 3, kind: output, shape index: {}]
  %s4 = sld [smem:[#allocation0]]
  $region30: #{tpu_custom_call.1} parent=0
    _
  %s6 = ssub.s32 1, %s4
  %s7 = scalar_select 0, %s6, %s4
  $region1: #{tpu_custom_call.1} parent=0
    #allocation2 [shape = 'u8[8192]{0}', space=vmem, size = 0x2000, scoped, tag = 'input window, operand 0, single buffered']
    #allocation3 [shape = 's32[1]{0}', space=sflag, size = 0x4, scoped, tag = 'scoped memory for tpu_custom_call.1']
    #allocation4 [shape = 's32[1]{0}', space=sflag, size = 0x4, scoped, tag = 'scoped memory for tpu_custom_call.1']
    #allocation5 [shape = 'u8[98304]{0}', space=vmem, size = 0x18000, scoped, tag = 'input window, operand 1, single buffered']
    #allocation6 [shape = 's32[1]{0}', space=sflag, size = 0x4, scoped, tag = 'scoped memory for tpu_custom_call.1']
    #allocation7 [shape = 'u8[4096]{0}', space=vmem, size = 0x1000, scoped, tag = 'output window, operand 0, single buffered']
    %8 = vsyncpa [#allocation3], 0
    %9 = vsyncpa [#allocation6], 0
    %10 = vsyncpa [#allocation4], 0
    // Predicated region
    $region2: #{tpu_custom_call.1} parent=1 // pred_check
      _
    $region3: #{tpu_custom_call.1} parent=1 // pred_check_branch
      %12 = sbr.rel (0) target = $region5
    $region4: #{tpu_custom_call.1} parent=1 // pred_region
      %s14 = ssub.s32 256, 256
      %15 = vsyncadd [#allocation3], %s14
      %s17 = sshll.u32 [#allocation2], 4
      %s18 = int_to_ptr.vmem [resolvable:$true] %s17
      %20 = dma.hbm_to_vmem [thread:$0]  %s0, 256, %s18, [#allocation3]
    $region5: #{tpu_custom_call.1} parent=1 // pred_fallthru
      _
    // Predicated region
    $region6: #{tpu_custom_call.1} parent=1 // pred_check
      _
    $region7: #{tpu_custom_call.1} parent=1 // pred_check_branch
      %22 = sbr.rel (0) target = $region9
    $region8: #{tpu_custom_call.1} parent=1 // pred_region
      %s24 = ssub.s32 3072, 3072
      %25 = vsyncadd [#allocation6], %s24
      %s26 = sshll.u32 [#allocation5], 4
      %s27 = int_to_ptr.vmem [resolvable:$true] %s26
      %32 = dma.hbm_to_vmem [thread:$0]  %s1, 3072, %s27, [#allocation6], 128, 128, 8
    $region9: #{tpu_custom_call.1} parent=1 // pred_fallthru
      _
    // Predicated region
    $region10: #{tpu_custom_call.1} parent=1 // pred_check
      _
    $region11: #{tpu_custom_call.1} parent=1 // pred_check_branch
      %34 = sbr.rel (0) target = $region13
    $region12: #{tpu_custom_call.1} parent=1 // pred_region
      _
    $region13: #{tpu_custom_call.1} parent=1 // pred_fallthru
      _
    // Predicated region
    $region14: #{tpu_custom_call.1} parent=1 // pred_check
      _
    $region15: #{tpu_custom_call.1} parent=1 // pred_check_branch
      %36 = sbr.rel (0) target = $region17
    $region16: #{tpu_custom_call.1} parent=1 // pred_region
      %37 = dma.done [#allocation3], 256
    $region17: #{tpu_custom_call.1} parent=1 // pred_fallthru
      _
    // Predicated region
    $region18: #{tpu_custom_call.1} parent=1 // pred_check
      _
    $region19: #{tpu_custom_call.1} parent=1 // pred_check_branch
      %39 = sbr.rel (0) target = $region21
    $region20: #{tpu_custom_call.1} parent=1 // pred_region
      %40 = dma.done [#allocation6], 3072
    $region21: #{tpu_custom_call.1} parent=1 // pred_fallthru
      _
    %v41 = vld [vmem:[#allocation2] sm:$0xff]
    %v42 = vld [vmem:[#allocation2 + $0x8] sm:$0xff]
    %v43 = vld [vmem:[#allocation5] sm:$0xff]
    %v44 = vld [vmem:[#allocation5 + $0x8] sm:$0xff]
    %v45 = vld [vmem:[#allocation5 + $0x10] sm:$0xff]
    %v46 = vld [vmem:[#allocation5 + $0x18] sm:$0xff]
    %v47 = vld [vmem:[#allocation5 + $0x20] sm:$0xff]
    %v48 = vld [vmem:[#allocation5 + $0x28] sm:$0xff]
    %v49 = vld [vmem:[#allocation5 + $0x30] sm:$0xff]
    %v50 = vld [vmem:[#allocation5 + $0x38] sm:$0xff]
    %v51 = vld [vmem:[#allocation5 + $0x40] sm:$0xff]
    %v52 = vld [vmem:[#allocation5 + $0x48] sm:$0xff]
    %v53 = vld [vmem:[#allocation5 + $0x50] sm:$0xff]
    %v54 = vld [vmem:[#allocation5 + $0x58] sm:$0xff]
    %v55 = vld [vmem:[#allocation5 + $0x60] sm:$0xff]
    %v56 = vld [vmem:[#allocation5 + $0x68] sm:$0xff]
    %v57 = vld [vmem:[#allocation5 + $0x70] sm:$0xff]
    %v58 = vld [vmem:[#allocation5 + $0x78] sm:$0xff]
    %v59 = vld [vmem:[#allocation5 + $0x80] sm:$0xff]
    %v60 = vld [vmem:[#allocation5 + $0x88] sm:$0xff]
    %v61 = vld [vmem:[#allocation5 + $0x90] sm:$0xff]
    %v62 = vld [vmem:[#allocation5 + $0x98] sm:$0xff]
    %v63 = vld [vmem:[#allocation5 + $0xa0] sm:$0xff]
    %v64 = vld [vmem:[#allocation5 + $0xa8] sm:$0xff]
    %v65 = vld [vmem:[#allocation5 + $0xb0] sm:$0xff]
    %v66 = vld [vmem:[#allocation5 + $0xb8] sm:$0xff]
    %v67 = vld [vmem:[%s2] sm:$0x1]
    %v69 = vlaneseq
    %v70 = vshrl.u32 %v69, 7
    %v71 = vsub.s32 0, %v70
    %v72 = vrot.slane %v67, %v71
    %vm74 = vcmask 523264
    %v76 = vsel %vm74, %v42, 0
    %78 = vmatprep.subr.mxu0 0.0
    %79 = vmatpush1.msra.mxu0 %v43
    %80 = vmatprep.subr.mxu0 0.0
    %81 = vmatpush1.msra.mxu0 %v44
    %82 = vmatprep.subr.mxu0 0.0
    %83 = vmatpush1.msra.mxu0 %v45
    %84 = vmatprep.subr.mxu0 0.0
    %85 = vmatpush1.msra.mxu0 %v46
    %86 = vmatprep.subr.mxu0 0.0
    %87 = vmatpush1.msra.mxu0 %v47
    %88 = vmatprep.subr.mxu0 0.0
    %89 = vmatpush1.msra.mxu0 %v48
    %90 = vmatprep.subr.mxu0 0.0
    %91 = vmatpush1.msra.mxu0 %v49
    %92 = vmatprep.subr.mxu0 0.0
    %93 = vmatpush1.msra.mxu0 %v50
    %94 = vmatprep.subr.mxu0 0.0
    %95 = vmatpush1.msra.mxu0 %v51
    %96 = vmatprep.subr.mxu0 0.0
    %97 = vmatpush1.msra.mxu0 %v52
    %98 = vmatprep.subr.mxu0 0.0
    %99 = vmatpush1.msra.mxu0 %v53
    %100 = vmatprep.subr.mxu0 0.0
    %101 = vmatpush1.msra.mxu0 %v54
    %102 = vmatprep.subr.mxu0 0.0
    %103 = vmatpush1.msra.mxu0 %v55
    %104 = vmatprep.subr.mxu0 0.0
    %105 = vmatpush1.msra.mxu0 %v56
    %106 = vmatprep.subr.mxu0 0.0
    %107 = vmatpush1.msra.mxu0 %v57
    %108 = vmatprep.subr.mxu0 0.0
    %109 = vmatpush1.msra.mxu0 %v58
    %110 = vmatprep.subr.mxu0 0.0
    %111 = vmatpush1.msra.mxu0 %v59
    %112 = vmatprep.subr.mxu0 0.0
    %113 = vmatpush1.msra.mxu0 %v60
    %114 = vmatprep.subr.mxu0 0.0
    %115 = vmatpush1.msra.mxu0 %v61
    %116 = vmatprep.subr.mxu0 0.0
    %117 = vmatpush1.msra.mxu0 %v62
    %118 = vmatprep.subr.mxu0 0.0
    %119 = vmatpush1.msra.mxu0 %v63
    %120 = vmatprep.subr.mxu0 0.0
    %121 = vmatpush1.msra.mxu0 %v64
    %122 = vmatprep.subr.mxu0 0.0
    %123 = vmatpush1.msra.mxu0 %v65
    %124 = vmatprep.subr.mxu0 0.0
    %125 = vmatpush1.msra.mxu0 %v66
    %126 = vmatprep.subr.mxu0 0.0
    %127 = vmatpush1.msra.mxu0 0.0
    %128 = vmatprep.subr.mxu0 0.0
    %129 = vmatpush1.msra.mxu0 0.0
    %130 = vmatprep.subr.mxu0 0.0
    %131 = vmatpush1.msra.mxu0 0.0
    %132 = vmatprep.subr.mxu0 0.0
    %133 = vmatpush1.msra.mxu0 0.0
    %134 = vmatprep.subr.mxu0 0.0
    %135 = vmatpush1.msra.mxu0 0.0
    %136 = vmatprep.subr.mxu0 0.0
    %137 = vmatpush1.msra.mxu0 0.0
    %138 = vmatprep.subr.mxu0 0.0
    %139 = vmatpush1.msra.mxu0 0.0
    %140 = vmatprep.subr.mxu0 0.0
    %141 = vmatpush1.msra.mxu0 0.0
    %142 = vmatprep.mubr.f32.mxu0 %v76
    %143 = vmatmul.mubr.f32.gmra.mrb[0].mxu0 %v41
    %v144 = vpop.f32.mrb[0].mxu0
    %v145 = vadd.f32 %v72, %v144
    %v146 = vpop.f32.mrb[0].mxu0
    %147 = vdwg.mxu0
    %148 = vst [vmem:[#allocation7] sm:$0xff] %v145
    // Predicated region
    $region22: #{tpu_custom_call.1} parent=1 // pred_check
      _
    $region23: #{tpu_custom_call.1} parent=1 // pred_check_branch
      %150 = sbr.rel (0) target = $region25
    $region24: #{tpu_custom_call.1} parent=1 // pred_region
      %s152 = ssub.s32 128, 128
      %153 = vsyncadd [#allocation4], %s152
      %s155 = sshll.u32 [#allocation7], 4
      %s156 = int_to_ptr.vmem [resolvable:$true] %s155
      %158 = dma.vmem_to_hbm [thread:$0]  %s156, 128, %s3, [#allocation4]
    $region25: #{tpu_custom_call.1} parent=1 // pred_fallthru
      _
    // Predicated region
    $region26: #{tpu_custom_call.1} parent=1 // pred_check
      _
    $region27: #{tpu_custom_call.1} parent=1 // pred_check_branch
      %160 = sbr.rel (0) target = $region29
    $region28: #{tpu_custom_call.1} parent=1 // pred_region
      %161 = dma.done [#allocation4], 128
    $region29: #{tpu_custom_call.1} parent=1 // pred_fallthru
      _
    %162 = vsyncpa [#allocation3], 1
    %163 = vsyncpa [#allocation6], 1
    %164 = vsyncpa [#allocation4], 1

</llo_original>
